<compile_context>
chip_gen: v7x
topology: tpu7x:2x2x1
jax: 0.10.0
libtpu: 0.0.40
codegen_flags: <defaults>
</compile_context>

<pallas_src>
import jax
import jax.numpy as jnp
from jax.experimental import pallas as pl
from jax.experimental.pallas import tpu as pltpu


def _round_up(x, m):
    return ((x + m - 1) // m) * m


def _vmem_limit_bytes():
    """~80% of this chip's physical VMEM, capped at 112 MiB (leaves headroom
    for compiler-internal scratch; never pins v7x's full 64 MiB)."""
    cap = None
    try:
        info = pltpu.get_tpu_info()
        for name in ("vmem_capacity_bytes", "vmem_bytes", "vmem_size_bytes"):
            v = getattr(info, name, None)
            if v:
                cap = int(v)
                break
    except Exception:
        cap = None
    if cap is None:
        cap = 64 * 1024 * 1024  # conservative: v7x per-TC physical VMEM
    return min(int(cap * 0.8), 112 * 1024 * 1024)


def _make_small_kernel(n):
    """Single-tile kernel: no grid, no accumulator, no pl.when."""

    def kernel(*refs):
        x_refs = refs[:n]
        w_ref, b_ref = refs[n], refs[n + 1]
        o_refs = refs[n + 2:]
        w = w_ref[...]
        bias = b_ref[...].astype(jnp.float32)
        for x_ref, o_ref in zip(x_refs, o_refs):
            acc = jnp.dot(x_ref[...], w, preferred_element_type=jnp.float32)
            o_ref[...] = (acc + bias).astype(o_ref.dtype)

    return kernel


def _make_tiled_kernel(n):
    """(M, N, K)-tiled kernel with f32 VMEM accumulators; bias added once in the
    epilogue on the last K step."""

    def kernel(*refs):
        x_refs = refs[:n]
        w_ref, b_ref = refs[n], refs[n + 1]
        o_refs = refs[n + 2:n + 2 + n]
        acc_refs = refs[n + 2 + n:]
        k = pl.program_id(2)

        @pl.when(k == 0)
        def _init():
            for acc in acc_refs:
                acc[...] = jnp.zeros_like(acc)

        w = w_ref[...]  # weight tile loaded once, shared by both activations
        for x_ref, acc in zip(x_refs, acc_refs):
            acc[...] += jnp.dot(x_ref[...], w, preferred_element_type=jnp.float32)

        @pl.when(k == pl.num_programs(2) - 1)
        def _finalize():
            bias = b_ref[...].astype(jnp.float32)
            for o_ref, acc in zip(o_refs, acc_refs):
                o_ref[...] = (acc[...] + bias).astype(o_ref.dtype)

    return kernel


def pallas_shared_linear(xs, w_t, b, *, tm=512, tn=512, tk=1024,
                         out_dtype=jnp.float32):
    """y_i = xs[i] @ w_t + b for every input in `xs` (all with the same shape),
    sharing one pallas_call / one weight+bias DMA stream.

    xs:  tuple of (M, d_emb) arrays
    w_t: (d_emb, d_hid)   (PyTorch weight transposed)
    b:   (1, d_hid)
    Returns a tuple of (M, d_hid) arrays.
    """
    n = len(xs)
    M, K = xs[0].shape
    for x in xs[1:]:
        assert x.shape == (M, K), "fused path requires equal input shapes"
    assert w_t.shape[0] == K
    N = w_t.shape[1]

    # bf16 operands for the MXU; accumulation and bias add stay f32.
    xs_c = tuple(x.astype(jnp.bfloat16) for x in xs)
    w_c = w_t.astype(jnp.bfloat16)
    b_c = b.astype(jnp.float32).reshape(1, N)

    # ---- tile selection: never pad M or N; only K is zero-padded when tiled ----
    tm_eff = M if M <= tm else tm          # full-dim block or multiple of 16
    grid_m = pl.cdiv(M, tm_eff)

    tn_eff = N if N <= tn else tn          # full-dim block or multiple of 128
    # v7x megacore: guarantee >=2 blocks along a parallel axis when skinny M
    # leaves grid_m == 1 (v5e/v6e single-TC unaffected).
    if grid_m == 1 and pl.cdiv(N, tn_eff) == 1 and N >= 256:
        tn_eff = _round_up(pl.cdiv(N, 2), 128)
    grid_n = pl.cdiv(N, tn_eff)

    if K <= tk:
        tk_eff, Kp = K, K                  # full-dim block, no padding at all
    else:
        tk_eff = tk                        # multiple of 128
        Kp = _round_up(K, tk_eff)          # K feeds the reduction -> zero-pad
    grid_k = Kp // tk_eff
    if Kp != K:
        xs_c = tuple(jnp.pad(x, ((0, 0), (0, Kp - K))) for x in xs_c)
        w_c = jnp.pad(w_c, ((0, Kp - K), (0, 0)))

    out_shapes = tuple(jax.ShapeDtypeStruct((M, N), out_dtype) for _ in range(n))

    # ---- single-tile fast path (demo-sized problems) ----
    if grid_m == 1 and grid_n == 1 and grid_k == 1:
        return pl.pallas_call(
            _make_small_kernel(n),
            out_shape=out_shapes,
        )(*xs_c, w_c, b_c)

    # ---- general tiled path ----
    x_spec = pl.BlockSpec((tm_eff, tk_eff), lambda i, j, k: (i, k))
    w_spec = pl.BlockSpec((tk_eff, tn_eff), lambda i, j, k: (k, j))
    b_spec = pl.BlockSpec((1, tn_eff), lambda i, j, k: (0, j))
    o_spec = pl.BlockSpec((tm_eff, tn_eff), lambda i, j, k: (i, j))

    return pl.pallas_call(
        _make_tiled_kernel(n),
        out_shape=out_shapes,
        grid_spec=pltpu.PrefetchScalarGridSpec(
            num_scalar_prefetch=0,
            grid=(grid_m, grid_n, grid_k),
            in_specs=[x_spec] * n + [w_spec, b_spec],
            out_specs=[o_spec] * n,
            scratch_shapes=[pltpu.VMEM((tm_eff, tn_eff), jnp.float32)] * n,
        ),
        compiler_params=pltpu.CompilerParams(
            dimension_semantics=("parallel", "parallel", "arbitrary"),
            vmem_limit_bytes=_vmem_limit_bytes(),
        ),
    )(*xs_c, w_c, b_c)


class SingleLinearPallas:
    """Mirror of the PyTorch SingleLinear module (shared nn.Linear on two inputs)."""

    def __init__(self, d_emb, d_hid, key):
        kw, kb = jax.random.split(key)
        # PyTorch nn.Linear init: U(-1/sqrt(d_emb), 1/sqrt(d_emb)) for weight & bias.
        bound = 1.0 / (d_emb ** 0.5)
        weight = jax.random.uniform(kw, (d_hid, d_emb), jnp.float32, -bound, bound)
        bias = jax.random.uniform(kb, (d_hid,), jnp.float32, -bound, bound)
        self.w_t = jnp.asarray(weight.T)               # (d_emb, d_hid)
        self.b = jnp.asarray(bias).reshape(1, d_hid)   # (1, d_hid)

    def __call__(self, rep_utt, rep_per):
        if rep_utt.shape == rep_per.shape:
            # Fused: both activations share one launch and one weight/bias DMA
            # stream; no concatenate round-trip through HBM.
            out_utt, out_per = pallas_shared_linear((rep_utt, rep_per),
                                                    self.w_t, self.b)
        else:
            (out_utt,) = pallas_shared_linear((rep_utt,), self.w_t, self.b)
            (out_per,) = pallas_shared_linear((rep_per,), self.w_t, self.b)
        return out_utt, out_per


if __name__ == "__main__":
    def ref_linear(x, w_t, b):
        # bf16-consistent reference (same operand precision as the kernel).
        return jnp.dot(x.astype(jnp.bfloat16), w_t.astype(jnp.bfloat16),
                       preferred_element_type=jnp.float32) + b

    # ---- demo shapes from the module: small, exercises the single-tile path ----
    d_emb, d_hid, batch = 32, 32, 8
    k_mod, k_u, k_p = jax.random.split(jax.random.PRNGKey(0), 3)
    model = SingleLinearPallas(d_emb, d_hid, k_mod)
    rep_utt = jax.random.normal(k_u, (batch, d_emb), jnp.float32)
    rep_per = jax.random.normal(k_p, (batch, d_emb), jnp.float32)

    out_utt, out_per = model(rep_utt, rep_per)
    jax.block_until_ready((out_utt, out_per))
    assert out_utt.shape == (batch, d_hid) and out_per.shape == (batch, d_hid)
    assert jnp.allclose(out_utt, ref_linear(rep_utt, model.w_t, model.b),
                        atol=2e-3, rtol=2e-3), "utt mismatch (small)"
    assert jnp.allclose(out_per, ref_linear(rep_per, model.w_t, model.b),
                        atol=2e-3, rtol=2e-3), "per mismatch (small)"

    # ---- mismatched batches: per-input (n=1) fallback path ----
    rep_per_b = jax.random.normal(k_p, (batch + 4, d_emb), jnp.float32)
    o_u, o_p = model(rep_utt, rep_per_b)
    jax.block_until_ready((o_u, o_p))
    assert jnp.allclose(o_p, ref_linear(rep_per_b, model.w_t, model.b),
                        atol=2e-3, rtol=2e-3), "per mismatch (fallback)"

    # ---- larger shapes: tiled path (K tiling + zero-pad, N split for megacore) ----
    d_emb2, d_hid2, batch2 = 2176, 384, 40
    k_mod2, k_u2, k_p2 = jax.random.split(jax.random.PRNGKey(1), 3)
    model2 = SingleLinearPallas(d_emb2, d_hid2, k_mod2)
    u2 = jax.random.normal(k_u2, (batch2, d_emb2), jnp.float32)
    p2 = jax.random.normal(k_p2, (batch2, d_emb2), jnp.float32)
    ou2, op2 = model2(u2, p2)
    jax.block_until_ready((ou2, op2))
    assert ou2.shape == (batch2, d_hid2) and op2.shape == (batch2, d_hid2)
    assert jnp.allclose(ou2, ref_linear(u2, model2.w_t, model2.b),
                        atol=2e-3, rtol=2e-3), "utt mismatch (tiled)"
    assert jnp.allclose(op2, ref_linear(p2, model2.w_t, model2.b),
                        atol=2e-3, rtol=2e-3), "per mismatch (tiled)"

    print("KERNEL_OK")
</pallas_src>

<mosaic_0001>
module attributes {stable_mosaic.version = 11 : i64} {
  func.func @kernel(%arg0: memref<8x32xbf16, #tpu.memory_space<vmem>>, %arg1: memref<8x32xbf16, #tpu.memory_space<vmem>>, %arg2: memref<32x32xbf16, #tpu.memory_space<vmem>>, %arg3: memref<1x32xf32, #tpu.memory_space<vmem>>, %arg4: memref<8x32xf32, #tpu.memory_space<vmem>>, %arg5: memref<8x32xf32, #tpu.memory_space<vmem>>) attributes {dimension_semantics = [], scalar_prefetch = 0 : i64, scratch_operands = 0 : i64, tpu.core_type = #tpu.core_type<tc>} {
    %c0 = arith.constant 0 : index
    %c0_0 = arith.constant 0 : index
    %0 = vector.load %arg2[%c0, %c0_0] : memref<32x32xbf16, #tpu.memory_space<vmem>>, vector<32x32xbf16>
    %c0_1 = arith.constant 0 : index
    %c0_2 = arith.constant 0 : index
    %1 = vector.load %arg3[%c0_1, %c0_2] : memref<1x32xf32, #tpu.memory_space<vmem>>, vector<1x32xf32>
    %c0_3 = arith.constant 0 : index
    %c0_4 = arith.constant 0 : index
    %2 = vector.load %arg0[%c0_3, %c0_4] : memref<8x32xbf16, #tpu.memory_space<vmem>>, vector<8x32xbf16>
    %cst = arith.constant dense<0.000000e+00> : vector<8x32xf32>
    %3 = tpu.matmul %2, %0, %cst {dimension_numbers = #tpu.dot_dimension_numbers<[1], [0], [0], [1], [0, 0, 1, 1], [], []>} : vector<8x32xbf16>, vector<32x32xbf16>, vector<8x32xf32> -> vector<8x32xf32>
    %4 = vector.broadcast %1 : vector<1x32xf32> to vector<8x32xf32>
    %5 = arith.addf %3, %4 : vector<8x32xf32>
    %c0_5 = arith.constant 0 : index
    %c0_6 = arith.constant 0 : index
    %6 = vector.load %arg4[%c0_5, %c0_6] : memref<8x32xf32, #tpu.memory_space<vmem>>, vector<8x32xf32>
    tpu.vector_store %arg4[%c0_5, %c0_6], %5 {strides = array<i32>} : memref<8x32xf32, #tpu.memory_space<vmem>>, vector<8x32xf32>,
    %c0_7 = arith.constant 0 : index
    %c0_8 = arith.constant 0 : index
    %7 = vector.load %arg1[%c0_7, %c0_8] : memref<8x32xbf16, #tpu.memory_space<vmem>>, vector<8x32xbf16>
    %cst_9 = arith.constant dense<0.000000e+00> : vector<8x32xf32>
    %8 = tpu.matmul %7, %0, %cst_9 {dimension_numbers = #tpu.dot_dimension_numbers<[1], [0], [0], [1], [0, 0, 1, 1], [], []>} : vector<8x32xbf16>, vector<32x32xbf16>, vector<8x32xf32> -> vector<8x32xf32>
    %9 = vector.broadcast %1 : vector<1x32xf32> to vector<8x32xf32>
    %10 = arith.addf %8, %9 : vector<8x32xf32>
    %c0_10 = arith.constant 0 : index
    %c0_11 = arith.constant 0 : index
    %11 = vector.load %arg5[%c0_10, %c0_11] : memref<8x32xf32, #tpu.memory_space<vmem>>, vector<8x32xf32>
    tpu.vector_store %arg5[%c0_10, %c0_11], %10 {strides = array<i32>} : memref<8x32xf32, #tpu.memory_space<vmem>>, vector<8x32xf32>,
    return
  }
}

</mosaic_0001>

<llo_original>
// kernel: tpu_custom_call.1
$region0: #{tpu_custom_call.1}
  #allocation0 [shape = 'u32[]', space=smem, size = 0x4, offset = 0x4, fixed_abs, tag = 'smem constant byte address 0x4 - core index']
  #allocation1 [shape = 'u32[144,128]{1,0:T(1,128)}', space=vmem, size = 0x12000, scoped, tag = 'internal scratch']
  %s0 = inlined_call_operand.hbm [shape: bf16[8,32], index: 0, kind: input, shape index: {}]
  %s1 = inlined_call_operand.hbm [shape: bf16[8,32], index: 1, kind: input, shape index: {}]
  %s2 = inlined_call_operand.hbm [shape: bf16[32,32], index: 2, kind: input, shape index: {}]
  %s3 = inlined_call_operand.vmem [shape: f32[1,32], index: 3, kind: input, shape index: {}]
  %s4 = inlined_call_operand.hbm [shape: f32[8,32], index: 4, kind: output, shape index: {0}]
  %s5 = inlined_call_operand.hbm [shape: f32[8,32], index: 5, kind: output, shape index: {1}]
  %6 = xla_tuple %s4, %s5
  %s7 = sld [smem:[#allocation0]]
  $region46: #{tpu_custom_call.1} parent=0
    _
  %s9 = ssub.s32 1, %s7
  %s10 = scalar_select 0, %s9, %s7
  $region1: #{tpu_custom_call.1} parent=0
    #allocation2 [shape = 'u8[2048]{0}', space=vmem, size = 0x800, scoped, tag = 'input window, operand 0, single buffered']
    #allocation3 [shape = 's32[1]{0}', space=sflag, size = 0x4, scoped, tag = 'scoped memory for tpu_custom_call.1']
    #allocation4 [shape = 's32[1]{0}', space=sflag, size = 0x4, scoped, tag = 'scoped memory for tpu_custom_call.1']
    #allocation5 [shape = 'u8[2048]{0}', space=vmem, size = 0x800, scoped, tag = 'input window, operand 1, single buffered']
    #allocation6 [shape = 's32[1]{0}', space=sflag, size = 0x4, scoped, tag = 'scoped memory for tpu_custom_call.1']
    #allocation7 [shape = 'u8[8192]{0}', space=vmem, size = 0x2000, scoped, tag = 'input window, operand 2, single buffered']
    #allocation8 [shape = 'u8[4096]{0}', space=vmem, size = 0x1000, scoped, tag = 'output window, operand 0, single buffered']
    #allocation9 [shape = 'u8[4096]{0}', space=vmem, size = 0x1000, scoped, tag = 'output window, operand 1, single buffered']
    #allocation10 [shape = 's32[1]{0}', space=sflag, size = 0x4, scoped, tag = 'scoped memory for tpu_custom_call.1']
    %11 = vsyncpa [#allocation3], 0
    %12 = vsyncpa [#allocation6], 0
    %13 = vsyncpa [#allocation4], 0
    %14 = vsyncpa [#allocation10], 0
    // Predicated region
    $region2: #{tpu_custom_call.1} parent=1 // pred_check
      _
    $region3: #{tpu_custom_call.1} parent=1 // pred_check_branch
      %16 = sbr.rel (0) target = $region5
    $region4: #{tpu_custom_call.1} parent=1 // pred_region
      %s18 = ssub.s32 64, 64
      %19 = vsyncadd [#allocation3], %s18
      %s21 = sshll.u32 [#allocation2], 4
      %s22 = int_to_ptr.vmem [resolvable:$true] %s21
      %24 = dma.hbm_to_vmem [thread:$0]  %s0, 64, %s22, [#allocation3]
    $region5: #{tpu_custom_call.1} parent=1 // pred_fallthru
      _
    // Predicated region
    $region6: #{tpu_custom_call.1} parent=1 // pred_check
      _
    $region7: #{tpu_custom_call.1} parent=1 // pred_check_branch
      %26 = sbr.rel (0) target = $region9
    $region8: #{tpu_custom_call.1} parent=1 // pred_region
      %s28 = ssub.s32 64, 64
      %29 = vsyncadd [#allocation6], %s28
      %s31 = sshll.u32 [#allocation5], 4
      %s32 = int_to_ptr.vmem [resolvable:$true] %s31
      %34 = dma.hbm_to_vmem [thread:$0]  %s1, 64, %s32, [#allocation6]
    $region9: #{tpu_custom_call.1} parent=1 // pred_fallthru
      _
    // Predicated region
    $region10: #{tpu_custom_call.1} parent=1 // pred_check
      _
    $region11: #{tpu_custom_call.1} parent=1 // pred_check_branch
      %36 = sbr.rel (0) target = $region13
    $region12: #{tpu_custom_call.1} parent=1 // pred_region
      %s38 = ssub.s32 256, 256
      %39 = vsyncadd [#allocation6], %s38
      %s40 = sshll.u32 [#allocation7], 4
      %s41 = int_to_ptr.vmem [resolvable:$true] %s40
      %46 = dma.hbm_to_vmem [thread:$0]  %s2, 256, %s41, [#allocation6], 64, 64, 4
    $region13: #{tpu_custom_call.1} parent=1 // pred_fallthru
      _
    // Predicated region
    $region14: #{tpu_custom_call.1} parent=1 // pred_check
      _
    $region15: #{tpu_custom_call.1} parent=1 // pred_check_branch
      %48 = sbr.rel (0) target = $region17
    $region16: #{tpu_custom_call.1} parent=1 // pred_region
      _
    $region17: #{tpu_custom_call.1} parent=1 // pred_fallthru
      _
    // Predicated region
    $region18: #{tpu_custom_call.1} parent=1 // pred_check
      _
    $region19: #{tpu_custom_call.1} parent=1 // pred_check_branch
      %50 = sbr.rel (0) target = $region21
    $region20: #{tpu_custom_call.1} parent=1 // pred_region
      %51 = dma.done [#allocation3], 64
    $region21: #{tpu_custom_call.1} parent=1 // pred_fallthru
      _
    // Predicated region
    $region22: #{tpu_custom_call.1} parent=1 // pred_check
      _
    $region23: #{tpu_custom_call.1} parent=1 // pred_check_branch
      %53 = sbr.rel (0) target = $region25
    $region24: #{tpu_custom_call.1} parent=1 // pred_region
      %54 = dma.done [#allocation6], 64
    $region25: #{tpu_custom_call.1} parent=1 // pred_fallthru
      _
    // Predicated region
    $region26: #{tpu_custom_call.1} parent=1 // pred_check
      _
    $region27: #{tpu_custom_call.1} parent=1 // pred_check_branch
      %56 = sbr.rel (0) target = $region29
    $region28: #{tpu_custom_call.1} parent=1 // pred_region
      %57 = dma.done [#allocation6], 256
    $region29: #{tpu_custom_call.1} parent=1 // pred_fallthru
      _
    %v59 = vld [vmem:[#allocation7] sm:$0xf]
    %v60 = vld [vmem:[#allocation7 + $0x4] sm:$0xf]
    %v61 = vld [vmem:[#allocation7 + $0x8] sm:$0xf]
    %v62 = vld [vmem:[#allocation7 + $0xc] sm:$0xf]
    %v63 = vld [vmem:[%s3] sm:$0x1]
    %v64 = vld [vmem:[#allocation2] sm:$0xf]
    %v66 = vlaneseq
    %v67 = vshrl.u32 %v66, 7
    %v68 = vsub.s32 0, %v67
    %v69 = vrot.slane %v63, %v68
    %v75 = vunpack.c.l.b16 %v59
    %v76 = vunpack.c.l.b16 %v60
    %v77 = vunpack.c.l.b16 %v61
    %v78 = vunpack.c.l.b16 %v62
    %v79 = vpack.c.b16 %v76, %v75
    %v80 = vpack.c.b16 %v78, %v77
    %vm83 = vcmask 261120
    %v85 = vsel %vm83, %v64, 0
    %87 = vmatprep.subr.bf16.mxu0 0
    %88 = vmatpush1.bf16.msra.mxu0 %v79
    %89 = vmatprep.subr.bf16.mxu0 0
    %90 = vmatpush1.bf16.msra.mxu0 %v80
    %91 = vmatprep.subr.bf16.mxu0 0
    %92 = vmatpush1.bf16.msra.mxu0 0
    %93 = vmatprep.subr.bf16.mxu0 0
    %94 = vmatpush1.bf16.msra.mxu0 0
    %95 = vmatprep.subr.bf16.mxu0 0
    %96 = vmatpush1.bf16.msra.mxu0 0
    %97 = vmatprep.subr.bf16.mxu0 0
    %98 = vmatpush1.bf16.msra.mxu0 0
    %99 = vmatprep.subr.bf16.mxu0 0
    %100 = vmatpush1.bf16.msra.mxu0 0
    %101 = vmatprep.subr.bf16.mxu0 0
    %102 = vmatpush1.bf16.msra.mxu0 0
    %103 = vmatprep.subr.bf16.mxu0 0
    %104 = vmatpush1.bf16.msra.mxu0 0
    %105 = vmatprep.subr.bf16.mxu0 0
    %106 = vmatpush1.bf16.msra.mxu0 0
    %107 = vmatprep.subr.bf16.mxu0 0
    %108 = vmatpush1.bf16.msra.mxu0 0
    %109 = vmatprep.subr.bf16.mxu0 0
    %110 = vmatpush1.bf16.msra.mxu0 0
    %111 = vmatprep.subr.bf16.mxu0 0
    %112 = vmatpush1.bf16.msra.mxu0 0
    %113 = vmatprep.subr.bf16.mxu0 0
    %114 = vmatpush1.bf16.msra.mxu0 0
    %115 = vmatprep.subr.bf16.mxu0 0
    %116 = vmatpush1.bf16.msra.mxu0 0
    %117 = vmatprep.subr.bf16.mxu0 0
    %118 = vmatpush1.bf16.msra.mxu0 0
    %119 = vmatprep.mubr.bf16.mxu0 0
    %120 = vmatmul.mubr.bf16.gmra.mrb[0].mxu0 %v85
    %v121 = vpop.f32.mrb[0].mxu0
    %v122 = vadd.f32 %v69, %v121
    %v123 = vpop.f32.mrb[0].mxu0
    %v124 = vpop.f32.mrb[0].mxu0
    %v125 = vpop.f32.mrb[0].mxu0
    %126 = vdwg.mxu0
    %127 = vst.msk [vmem:[#allocation8] sm:$0xff] %vm83, %v122
    %v128 = vld [vmem:[#allocation5] sm:$0xf]
    %v130 = vsel %vm83, %v128, 0
    %132 = vmatprep.subr.bf16.mxu0 0
    %133 = vmatpush1.bf16.msra.mxu0 %v79
    %134 = vmatprep.subr.bf16.mxu0 0
    %135 = vmatpush1.bf16.msra.mxu0 %v80
    %136 = vmatprep.subr.bf16.mxu0 0
    %137 = vmatpush1.bf16.msra.mxu0 0
    %138 = vmatprep.subr.bf16.mxu0 0
    %139 = vmatpush1.bf16.msra.mxu0 0
    %140 = vmatprep.subr.bf16.mxu0 0
    %141 = vmatpush1.bf16.msra.mxu0 0
    %142 = vmatprep.subr.bf16.mxu0 0
    %143 = vmatpush1.bf16.msra.mxu0 0
    %144 = vmatprep.subr.bf16.mxu0 0
    %145 = vmatpush1.bf16.msra.mxu0 0
    %146 = vmatprep.subr.bf16.mxu0 0
    %147 = vmatpush1.bf16.msra.mxu0 0
    %148 = vmatprep.subr.bf16.mxu0 0
    %149 = vmatpush1.bf16.msra.mxu0 0
    %150 = vmatprep.subr.bf16.mxu0 0
    %151 = vmatpush1.bf16.msra.mxu0 0
    %152 = vmatprep.subr.bf16.mxu0 0
    %153 = vmatpush1.bf16.msra.mxu0 0
    %154 = vmatprep.subr.bf16.mxu0 0
    %155 = vmatpush1.bf16.msra.mxu0 0
    %156 = vmatprep.subr.bf16.mxu0 0
    %157 = vmatpush1.bf16.msra.mxu0 0
    %158 = vmatprep.subr.bf16.mxu0 0
    %159 = vmatpush1.bf16.msra.mxu0 0
    %160 = vmatprep.subr.bf16.mxu0 0
    %161 = vmatpush1.bf16.msra.mxu0 0
    %162 = vmatprep.subr.bf16.mxu0 0
    %163 = vmatpush1.bf16.msra.mxu0 0
    %164 = vmatprep.mubr.bf16.mxu0 0
    %165 = vmatmul.mubr.bf16.gmra.mrb[0].mxu0 %v130
    %v166 = vpop.f32.mrb[0].mxu0
    %v167 = vadd.f32 %v69, %v166
    %v168 = vpop.f32.mrb[0].mxu0
    %v169 = vpop.f32.mrb[0].mxu0
    %v170 = vpop.f32.mrb[0].mxu0
    %171 = vdwg.mxu0
    %172 = vst.msk [vmem:[#allocation9] sm:$0xff] %vm83, %v167
    // Predicated region
    $region30: #{tpu_custom_call.1} parent=1 // pred_check
      _
    $region31: #{tpu_custom_call.1} parent=1 // pred_check_branch
      %174 = sbr.rel (0) target = $region33
    $region32: #{tpu_custom_call.1} parent=1 // pred_region
      %s176 = ssub.s32 128, 128
      %177 = vsyncadd [#allocation4], %s176
      %s179 = sshll.u32 [#allocation8], 4
      %s180 = int_to_ptr.vmem [resolvable:$true] %s179
      %182 = dma.vmem_to_hbm [thread:$0]  %s180, 128, %s4, [#allocation4]
    $region33: #{tpu_custom_call.1} parent=1 // pred_fallthru
      _
    // Predicated region
    $region34: #{tpu_custom_call.1} parent=1 // pred_check
      _
    $region35: #{tpu_custom_call.1} parent=1 // pred_check_branch
      %184 = sbr.rel (0) target = $region37
    $region36: #{tpu_custom_call.1} parent=1 // pred_region
      %s186 = ssub.s32 128, 128
      %187 = vsyncadd [#allocation10], %s186
      %s189 = sshll.u32 [#allocation9], 4
      %s190 = int_to_ptr.vmem [resolvable:$true] %s189
      %192 = dma.vmem_to_hbm [thread:$0]  %s190, 128, %s5, [#allocation10]
    $region37: #{tpu_custom_call.1} parent=1 // pred_fallthru
      _
    // Predicated region
    $region38: #{tpu_custom_call.1} parent=1 // pred_check
      _
    $region39: #{tpu_custom_call.1} parent=1 // pred_check_branch
      %194 = sbr.rel (0) target = $region41
    $region40: #{tpu_custom_call.1} parent=1 // pred_region
      %195 = dma.done [#allocation4], 128
    $region41: #{tpu_custom_call.1} parent=1 // pred_fallthru
      _
    // Predicated region
    $region42: #{tpu_custom_call.1} parent=1 // pred_check
      _
    $region43: #{tpu_custom_call.1} parent=1 // pred_check_branch
      %197 = sbr.rel (0) target = $region45
    $region44: #{tpu_custom_call.1} parent=1 // pred_region
      %198 = dma.done [#allocation10], 128
    $region45: #{tpu_custom_call.1} parent=1 // pred_fallthru
      _
    %199 = vsyncpa [#allocation3], 1
    %200 = vsyncpa [#allocation6], 1
    %201 = vsyncpa [#allocation4], 1
    %202 = vsyncpa [#allocation10], 1

</llo_original>
